<compile_context>
chip_gen: v6e
topology: v6e:2x2x1
jax: 0.10.0
libtpu: 0.0.40
codegen_flags: <defaults>
</compile_context>

<pallas_src>
import jax
import jax.numpy as jnp
from jax.experimental import pallas as pl
from jax.experimental.pallas import tpu as pltpu

HIDDEN = 256


def _round_up(n, m):
    return ((n + m - 1) // m) * m


# ----------------------------- Pallas kernel -------------------------------

def _soft_q_kernel(x_ref, a_ref, w1x_ref, w1a_ref, b1_ref, w2_ref, b2_ref,
                   w3_ref, b3_ref, w4_ref, b4_ref, out_ref):
    cdt = w2_ref.dtype   # matmul-input dtype of the 256x256 layers (bf16)

    # Layer 1 in f32 (concat-free): two partial products share one f32
    # accumulator; K = obs+act is tiny so the f32 MXU path costs nothing and
    # keeps raw observation/action magnitudes out of bf16.
    h = jnp.dot(x_ref[...].astype(jnp.float32), w1x_ref[...],
                preferred_element_type=jnp.float32)
    h = h + jnp.dot(a_ref[...].astype(jnp.float32), w1a_ref[...],
                    preferred_element_type=jnp.float32)
    h = jnp.tanh(h + b1_ref[...])                         # f32 bias + tanh

    # Layers 2 & 3: bf16 MXU inputs, f32 accumulate, f32 bias + tanh.
    h = jnp.tanh(jnp.dot(h.astype(cdt), w2_ref[...],
                         preferred_element_type=jnp.float32) + b2_ref[...])
    h = jnp.tanh(jnp.dot(h.astype(cdt), w3_ref[...],
                         preferred_element_type=jnp.float32) + b3_ref[...])

    # Layer 4: (1,256) @ (256,tb) -> lane-dense batch-major (1, tb) slab.
    q = jnp.dot(w4_ref[...], h.T, preferred_element_type=jnp.float32)
    out_ref[...] = q + b4_ref[...]


def soft_q_forward(x, a, params, *, tile_b=512):
    """x: (B, obs_dim), a: (B, act_dim) -> q: (B, 1) float32."""
    B, obs_dim = x.shape
    act_dim = a.shape[1]

    # Tile selection: at least 2 tiles once B >= 256 (lets v7x shard the
    # batch axis across both TensorCores), tb ~= ceil(B/n) rounded to the
    # 8-row sublane so padding waste stays small for any B.
    n_tiles = max(pl.cdiv(B, tile_b), 2 if B >= 256 else 1)
    tb = _round_up(pl.cdiv(B, n_tiles), 8)
    Bp = n_tiles * tb
    if Bp != B:
        pad = Bp - B
        x = jnp.pad(x, ((0, pad), (0, 0)))
        a = jnp.pad(a, ((0, pad), (0, 0)))

    def batch_spec(ncols):
        return pl.BlockSpec((tb, ncols), lambda i: (i, 0))

    def resident_spec(arr):
        # Whole (small) weight/bias as one block; constant index_map keeps it
        # VMEM-resident across grid iterations (no re-DMA per batch tile).
        return pl.BlockSpec(arr.shape, lambda i: (0, 0))

    weights = (params["w1x"], params["w1a"], params["b1"],
               params["w2"], params["b2"],
               params["w3"], params["b3"],
               params["w4"], params["b4"])

    out = pl.pallas_call(
        _soft_q_kernel,
        grid=(n_tiles,),
        # Batch-major lane-dense output: one (1, tb) row of q values per grid
        # step; the leading (tile) dim is squeezed out of the kernel ref.
        out_shape=jax.ShapeDtypeStruct((n_tiles, 1, tb), jnp.float32),
        in_specs=[batch_spec(obs_dim), batch_spec(act_dim)]
                 + [resident_spec(w) for w in weights],
        out_specs=pl.BlockSpec((None, 1, tb), lambda i: (i, 0, 0)),
        compiler_params=pltpu.CompilerParams(
            dimension_semantics=("parallel",)),
    )(x, a, *weights)

    return out.reshape(Bp)[:B].reshape(B, 1)


# --------------------------- parameter creation -----------------------------

def init_params(key, obs_dim, act_dim, hidden=HIDDEN,
                param_dtype=jnp.bfloat16):
    """Mirror layer_init: orthogonal(std=sqrt(2)) weights, zero biases.
    Weights are stored (in, out) so the kernel computes x @ W + b.  w1 is
    split into the obs / act halves and (with w4, biases) kept in f32; the
    big 256x256 weights are stored bf16 for the MXU fast path."""
    gain = 2.0 ** 0.5
    ortho = jax.nn.initializers.orthogonal(scale=gain)
    k1, k2, k3, k4 = jax.random.split(key, 4)
    in_dim = obs_dim + act_dim

    w1 = ortho(k1, (in_dim, hidden), jnp.float32)
    w4 = ortho(k4, (hidden, 1), jnp.float32)

    return {
        "w1x": w1[:obs_dim],                                   # f32 (L1 in f32)
        "w1a": w1[obs_dim:],                                   # f32
        "b1": jnp.zeros((1, hidden), jnp.float32),
        "w2": ortho(k2, (hidden, hidden), jnp.float32).astype(param_dtype),
        "b2": jnp.zeros((1, hidden), jnp.float32),
        "w3": ortho(k3, (hidden, hidden), jnp.float32).astype(param_dtype),
        "b3": jnp.zeros((1, hidden), jnp.float32),
        "w4": w4.T,                                            # (1, hidden) f32
        "b4": jnp.zeros((1, 1), jnp.float32),
    }


# ---------------------------------- main ------------------------------------

if __name__ == "__main__":
    key = jax.random.PRNGKey(0)
    k_params, k_x, k_a = jax.random.split(key, 3)

    B, OBS_DIM, ACT_DIM = 8, 16, 8   # small shapes consistent with the module

    params = init_params(k_params, OBS_DIM, ACT_DIM, hidden=HIDDEN)
    x = jax.random.normal(k_x, (B, OBS_DIM), dtype=jnp.float32)
    a = jax.random.normal(k_a, (B, ACT_DIM), dtype=jnp.float32)

    q = soft_q_forward(x, a, params)
    q = jax.block_until_ready(q)

    # Pure-JAX f32 reference of the same math (weights de-quantized to f32).
    w1 = jnp.concatenate([params["w1x"], params["w1a"]], axis=0)
    xa = jnp.concatenate([x, a], axis=1)
    h = jnp.tanh(xa @ w1 + params["b1"])
    h = jnp.tanh(h @ params["w2"].astype(jnp.float32) + params["b2"])
    h = jnp.tanh(h @ params["w3"].astype(jnp.float32) + params["b3"])
    q_ref = h @ params["w4"].T + params["b4"]

    assert q.shape == (B, 1)
    # bf16 matmul inputs on layers 2/3 (f32 accumulate) -> loose tolerance.
    assert jnp.allclose(q, q_ref, atol=5e-2, rtol=5e-2), (
        jnp.max(jnp.abs(q - q_ref)))

    print("KERNEL_OK")
</pallas_src>

<mosaic_0001>
module attributes {stable_mosaic.version = 11 : i64} {
  func.func @_soft_q_kernel(%arg0: i32, %arg1: memref<8x16xf32, #tpu.memory_space<vmem>>, %arg2: memref<8x8xf32, #tpu.memory_space<vmem>>, %arg3: memref<16x256xf32, #tpu.memory_space<vmem>>, %arg4: memref<8x256xf32, #tpu.memory_space<vmem>>, %arg5: memref<1x256xf32, #tpu.memory_space<vmem>>, %arg6: memref<256x256xbf16, #tpu.memory_space<vmem>>, %arg7: memref<1x256xf32, #tpu.memory_space<vmem>>, %arg8: memref<256x256xbf16, #tpu.memory_space<vmem>>, %arg9: memref<1x256xf32, #tpu.memory_space<vmem>>, %arg10: memref<1x256xf32, #tpu.memory_space<vmem>>, %arg11: memref<1x1xf32, #tpu.memory_space<vmem>>, %arg12: memref<1x1x8xf32, #tpu.memory_space<vmem>>) attributes {dimension_semantics = [#tpu.dimension_semantics<parallel>], iteration_bounds = array<i64: 1>, scalar_prefetch = 0 : i64, scratch_operands = 0 : i64, tpu.core_type = #tpu.core_type<tc>, window_params = [{transform_indices = @transform_0, window_bounds = array<i64: 8, 16>}, {transform_indices = @transform_1, window_bounds = array<i64: 8, 8>}, {pipeline_mode = #tpu.pipeline_mode<synchronous>, transform_indices = @transform_2, window_bounds = array<i64: 16, 256>}, {pipeline_mode = #tpu.pipeline_mode<synchronous>, transform_indices = @transform_3, window_bounds = array<i64: 8, 256>}, {pipeline_mode = #tpu.pipeline_mode<synchronous>, transform_indices = @transform_4, window_bounds = array<i64: 1, 256>}, {pipeline_mode = #tpu.pipeline_mode<synchronous>, transform_indices = @transform_5, window_bounds = array<i64: 256, 256>}, {pipeline_mode = #tpu.pipeline_mode<synchronous>, transform_indices = @transform_6, window_bounds = array<i64: 1, 256>}, {pipeline_mode = #tpu.pipeline_mode<synchronous>, transform_indices = @transform_7, window_bounds = array<i64: 256, 256>}, {pipeline_mode = #tpu.pipeline_mode<synchronous>, transform_indices = @transform_8, window_bounds = array<i64: 1, 256>}, {pipeline_mode = #tpu.pipeline_mode<synchronous>, transform_indices = @transform_9, window_bounds = array<i64: 1, 256>}, {pipeline_mode = #tpu.pipeline_mode<synchronous>, transform_indices = @transform_10, window_bounds = array<i64: 1, 1>}, {transform_indices = @transform_11, window_bounds = array<i64: 1, 1, 8>}]} {
    %c0 = arith.constant 0 : index
    %c0_0 = arith.constant 0 : index
    %0 = vector.load %arg1[%c0, %c0_0] : memref<8x16xf32, #tpu.memory_space<vmem>>, vector<8x16xf32>
    %c0_1 = arith.constant 0 : index
    %c0_2 = arith.constant 0 : index
    %1 = vector.load %arg3[%c0_1, %c0_2] : memref<16x256xf32, #tpu.memory_space<vmem>>, vector<16x256xf32>
    %cst = arith.constant dense<0.000000e+00> : vector<8x256xf32>
    %2 = tpu.matmul %0, %1, %cst {dimension_numbers = #tpu.dot_dimension_numbers<[1], [0], [0], [1], [0, 0, 1, 1], [], []>} : vector<8x16xf32>, vector<16x256xf32>, vector<8x256xf32> -> vector<8x256xf32>
    %c0_3 = arith.constant 0 : index
    %c0_4 = arith.constant 0 : index
    %3 = vector.load %arg2[%c0_3, %c0_4] : memref<8x8xf32, #tpu.memory_space<vmem>>, vector<8x8xf32>
    %c0_5 = arith.constant 0 : index
    %c0_6 = arith.constant 0 : index
    %4 = vector.load %arg4[%c0_5, %c0_6] : memref<8x256xf32, #tpu.memory_space<vmem>>, vector<8x256xf32>
    %cst_7 = arith.constant dense<0.000000e+00> : vector<8x256xf32>
    %5 = tpu.matmul %3, %4, %cst_7 {dimension_numbers = #tpu.dot_dimension_numbers<[1], [0], [0], [1], [0, 0, 1, 1], [], []>} : vector<8x8xf32>, vector<8x256xf32>, vector<8x256xf32> -> vector<8x256xf32>
    %6 = arith.addf %2, %5 : vector<8x256xf32>
    %c0_8 = arith.constant 0 : index
    %c0_9 = arith.constant 0 : index
    %7 = vector.load %arg5[%c0_8, %c0_9] : memref<1x256xf32, #tpu.memory_space<vmem>>, vector<1x256xf32>
    %8 = vector.broadcast %7 : vector<1x256xf32> to vector<8x256xf32>
    %9 = arith.addf %6, %8 : vector<8x256xf32>
    %10 = math.tanh %9 : vector<8x256xf32>
    %11 = arith.truncf %10 : vector<8x256xf32> to vector<8x256xbf16>
    %c0_10 = arith.constant 0 : index
    %c0_11 = arith.constant 0 : index
    %12 = vector.load %arg6[%c0_10, %c0_11] : memref<256x256xbf16, #tpu.memory_space<vmem>>, vector<256x256xbf16>
    %cst_12 = arith.constant dense<0.000000e+00> : vector<8x256xf32>
    %13 = tpu.matmul %11, %12, %cst_12 {dimension_numbers = #tpu.dot_dimension_numbers<[1], [0], [0], [1], [0, 0, 1, 1], [], []>} : vector<8x256xbf16>, vector<256x256xbf16>, vector<8x256xf32> -> vector<8x256xf32>
    %c0_13 = arith.constant 0 : index
    %c0_14 = arith.constant 0 : index
    %14 = vector.load %arg7[%c0_13, %c0_14] : memref<1x256xf32, #tpu.memory_space<vmem>>, vector<1x256xf32>
    %15 = vector.broadcast %14 : vector<1x256xf32> to vector<8x256xf32>
    %16 = arith.addf %13, %15 : vector<8x256xf32>
    %17 = math.tanh %16 : vector<8x256xf32>
    %18 = arith.truncf %17 : vector<8x256xf32> to vector<8x256xbf16>
    %c0_15 = arith.constant 0 : index
    %c0_16 = arith.constant 0 : index
    %19 = vector.load %arg8[%c0_15, %c0_16] : memref<256x256xbf16, #tpu.memory_space<vmem>>, vector<256x256xbf16>
    %cst_17 = arith.constant dense<0.000000e+00> : vector<8x256xf32>
    %20 = tpu.matmul %18, %19, %cst_17 {dimension_numbers = #tpu.dot_dimension_numbers<[1], [0], [0], [1], [0, 0, 1, 1], [], []>} : vector<8x256xbf16>, vector<256x256xbf16>, vector<8x256xf32> -> vector<8x256xf32>
    %c0_18 = arith.constant 0 : index
    %c0_19 = arith.constant 0 : index
    %21 = vector.load %arg9[%c0_18, %c0_19] : memref<1x256xf32, #tpu.memory_space<vmem>>, vector<1x256xf32>
    %22 = vector.broadcast %21 : vector<1x256xf32> to vector<8x256xf32>
    %23 = arith.addf %20, %22 : vector<8x256xf32>
    %24 = math.tanh %23 : vector<8x256xf32>
    %c0_20 = arith.constant 0 : index
    %c0_21 = arith.constant 0 : index
    %25 = vector.load %arg10[%c0_20, %c0_21] : memref<1x256xf32, #tpu.memory_space<vmem>>, vector<1x256xf32>
    %26 = tpu.transpose %24, [1, 0] : vector<8x256xf32> -> vector<256x8xf32>
    %cst_22 = arith.constant dense<0.000000e+00> : vector<1x8xf32>
    %27 = tpu.matmul %25, %26, %cst_22 {dimension_numbers = #tpu.dot_dimension_numbers<[1], [0], [0], [1], [0, 0, 1, 1], [], []>} : vector<1x256xf32>, vector<256x8xf32>, vector<1x8xf32> -> vector<1x8xf32>
    %c0_23 = arith.constant 0 : index
    %c0_24 = arith.constant 0 : index
    %28 = vector.load %arg11[%c0_23, %c0_24] : memref<1x1xf32, #tpu.memory_space<vmem>>, vector<1x1xf32>
    %29 = vector.broadcast %28 : vector<1x1xf32> to vector<1x8xf32>
    %30 = arith.addf %27, %29 : vector<1x8xf32>
    %c0_25 = arith.constant 0 : index
    %c0_26 = arith.constant 0 : index
    %c0_27 = arith.constant 0 : index
    %31 = vector.load %arg12[%c0_25, %c0_26, %c0_27] : memref<1x1x8xf32, #tpu.memory_space<vmem>>, vector<1x1x8xf32>
    %32 = vector.shape_cast %31 : vector<1x1x8xf32> to vector<1x8xf32>
    %33 = vector.shape_cast %30 : vector<1x8xf32> to vector<1x1x8xf32>
    tpu.vector_store %arg12[%c0_25, %c0_26, %c0_27], %33 {strides = array<i32>} : memref<1x1x8xf32, #tpu.memory_space<vmem>>, vector<1x1x8xf32>,
    return
  }
  func.func @transform_0(%arg0: i32) -> (i32, i32) {
    %c0_i32 = arith.constant 0 : i32
    %c0_i32_0 = arith.constant 0 : i32
    return %arg0, %c0_i32 : i32, i32
  }
  func.func @transform_1(%arg0: i32) -> (i32, i32) {
    %c0_i32 = arith.constant 0 : i32
    %c0_i32_0 = arith.constant 0 : i32
    return %arg0, %c0_i32 : i32, i32
  }
  func.func @transform_2(%arg0: i32) -> (i32, i32) {
    %c0_i32 = arith.constant 0 : i32
    %c0_i32_0 = arith.constant 0 : i32
    %c0_i32_1 = arith.constant 0 : i32
    return %c0_i32, %c0_i32_0 : i32, i32
  }
  func.func @transform_3(%arg0: i32) -> (i32, i32) {
    %c0_i32 = arith.constant 0 : i32
    %c0_i32_0 = arith.constant 0 : i32
    %c0_i32_1 = arith.constant 0 : i32
    return %c0_i32, %c0_i32_0 : i32, i32
  }
  func.func @transform_4(%arg0: i32) -> (i32, i32) {
    %c0_i32 = arith.constant 0 : i32
    %c0_i32_0 = arith.constant 0 : i32
    %c0_i32_1 = arith.constant 0 : i32
    return %c0_i32, %c0_i32_0 : i32, i32
  }
  func.func @transform_5(%arg0: i32) -> (i32, i32) {
    %c0_i32 = arith.constant 0 : i32
    %c0_i32_0 = arith.constant 0 : i32
    %c0_i32_1 = arith.constant 0 : i32
    return %c0_i32, %c0_i32_0 : i32, i32
  }
  func.func @transform_6(%arg0: i32) -> (i32, i32) {
    %c0_i32 = arith.constant 0 : i32
    %c0_i32_0 = arith.constant 0 : i32
    %c0_i32_1 = arith.constant 0 : i32
    return %c0_i32, %c0_i32_0 : i32, i32
  }
  func.func @transform_7(%arg0: i32) -> (i32, i32) {
    %c0_i32 = arith.constant 0 : i32
    %c0_i32_0 = arith.constant 0 : i32
    %c0_i32_1 = arith.constant 0 : i32
    return %c0_i32, %c0_i32_0 : i32, i32
  }
  func.func @transform_8(%arg0: i32) -> (i32, i32) {
    %c0_i32 = arith.constant 0 : i32
    %c0_i32_0 = arith.constant 0 : i32
    %c0_i32_1 = arith.constant 0 : i32
    return %c0_i32, %c0_i32_0 : i32, i32
  }
  func.func @transform_9(%arg0: i32) -> (i32, i32) {
    %c0_i32 = arith.constant 0 : i32
    %c0_i32_0 = arith.constant 0 : i32
    %c0_i32_1 = arith.constant 0 : i32
    return %c0_i32, %c0_i32_0 : i32, i32
  }
  func.func @transform_10(%arg0: i32) -> (i32, i32) {
    %c0_i32 = arith.constant 0 : i32
    %c0_i32_0 = arith.constant 0 : i32
    %c0_i32_1 = arith.constant 0 : i32
    return %c0_i32, %c0_i32_0 : i32, i32
  }
  func.func @transform_11(%arg0: i32) -> (i32, i32, i32) {
    %c0_i32 = arith.constant 0 : i32
    %c0_i32_0 = arith.constant 0 : i32
    %c0_i32_1 = arith.constant 0 : i32
    return %arg0, %c0_i32, %c0_i32_0 : i32, i32, i32
  }
}

</mosaic_0001>

<llo_original>
// kernel: tpu_custom_call.1
$region0: #{tpu_custom_call.1}
  #allocation0 [shape = 'u32[]', space=smem, size = 0x4, offset = 0x4, fixed_abs, tag = 'smem constant byte address 0x4 - core index']
  #allocation1 [shape = 'u32[144,128]{1,0:T(1,128)}', space=vmem, size = 0x12000, scoped, tag = 'internal scratch']
  #allocation2 [shape = 'f32[1,1]{1,0:T(1,128)S(1)}', space=vmem, size = 0x200, scoped, tag = 'scoped memory for tpu_custom_call.1']
  %s0 = inlined_call_operand.hbm [shape: f32[8,16], index: 0, kind: input, shape index: {}]
  %s1 = inlined_call_operand.hbm [shape: f32[8,8], index: 1, kind: input, shape index: {}]
  %s2 = inlined_call_operand.hbm [shape: f32[16,256], index: 2, kind: input, shape index: {}]
  %s3 = inlined_call_operand.hbm [shape: f32[8,256], index: 3, kind: input, shape index: {}]
  %s4 = inlined_call_operand.vmem [shape: f32[1,256], index: 4, kind: input, shape index: {}]
  %s5 = inlined_call_operand.hbm [shape: bf16[256,256], index: 5, kind: input, shape index: {}]
  %s6 = inlined_call_operand.vmem [shape: f32[1,256], index: 6, kind: input, shape index: {}]
  %s7 = inlined_call_operand.hbm [shape: bf16[256,256], index: 7, kind: input, shape index: {}]
  %s8 = inlined_call_operand.vmem [shape: f32[1,256], index: 8, kind: input, shape index: {}]
  %s9 = inlined_call_operand.vmem [shape: f32[1,256], index: 9, kind: input, shape index: {}]
  %s10 = inlined_call_operand.<no memory space> [shape: f32[1,1], index: 10, kind: input, shape index: {}]
  %s11 = inlined_call_operand.hbm [shape: f32[1,1,8], index: 11, kind: output, shape index: {}]
  %s12 = sld [smem:[#allocation0]]
  $region78: #{tpu_custom_call.1} parent=0
    _
  %s14 = ssub.s32 1, %s12
  %s15 = scalar_select 0, %s14, %s12
  %v16 = vstv %s10
  %17 = vst [vmem:[#allocation2] sm:$0x1] %v16
  $region1: #{tpu_custom_call.1} parent=0
    #allocation3 [shape = 'u8[4096]{0}', space=vmem, size = 0x1000, scoped, tag = 'input window, operand 0, single buffered']
    #allocation4 [shape = 's32[1]{0}', space=sflag, size = 0x4, scoped, tag = 'scoped memory for tpu_custom_call.1']
    #allocation5 [shape = 's32[1]{0}', space=sflag, size = 0x4, scoped, tag = 'scoped memory for tpu_custom_call.1']
    #allocation6 [shape = 'u8[4096]{0}', space=vmem, size = 0x1000, scoped, tag = 'input window, operand 1, single buffered']
    #allocation7 [shape = 's32[1]{0}', space=sflag, size = 0x4, scoped, tag = 'scoped memory for tpu_custom_call.1']
    #allocation8 [shape = 'u8[16384]{0}', space=vmem, size = 0x4000, scoped, tag = 'input window, operand 2, single buffered']
    #allocation9 [shape = 'u8[8192]{0}', space=vmem, size = 0x2000, scoped, tag = 'input window, operand 3, single buffered']
    #allocation10 [shape = 's32[1]{0}', space=sflag, size = 0x4, scoped, tag = 'scoped memory for tpu_custom_call.1']
    #allocation11 [shape = 'u8[131072]{0}', space=vmem, size = 0x20000, scoped, tag = 'input window, operand 5, single buffered']
    #allocation12 [shape = 'u8[131072]{0}', space=vmem, size = 0x20000, scoped, tag = 'input window, operand 7, single buffered']
    #allocation13 [shape = 's32[1]{0}', space=sflag, size = 0x4, scoped, tag = 'scoped memory for tpu_custom_call.1']
    #allocation14 [shape = 'u8[512]{0}', space=vmem, size = 0x400, scoped, tag = 'output window, operand 0, single buffered']
    %18 = vsyncpa [#allocation4], 0
    %19 = vsyncpa [#allocation7], 0
    %20 = vsyncpa [#allocation10], 0
    %21 = vsyncpa [#allocation13], 0
    %22 = vsyncpa [#allocation5], 0
    // Predicated region
    $region2: #{tpu_custom_call.1} parent=1 // pred_check
      _
    $region3: #{tpu_custom_call.1} parent=1 // pred_check_branch
      %24 = sbr.rel (0) target = $region5
    $region4: #{tpu_custom_call.1} parent=1 // pred_region
      %s26 = ssub.s32 128, 128
      %27 = vsyncadd [#allocation4], %s26
      %s29 = sshll.u32 [#allocation3], 4
      %s30 = int_to_ptr.vmem [resolvable:$true] %s29
      %32 = dma.hbm_to_vmem [thread:$0]  %s0, 128, %s30, [#allocation4]
    $region5: #{tpu_custom_call.1} parent=1 // pred_fallthru
      _
    // Predicated region
    $region6: #{tpu_custom_call.1} parent=1 // pred_check
      _
    $region7: #{tpu_custom_call.1} parent=1 // pred_check_branch
      %34 = sbr.rel (0) target = $region9
    $region8: #{tpu_custom_call.1} parent=1 // pred_region
      %s36 = ssub.s32 128, 128
      %37 = vsyncadd [#allocation7], %s36
      %s39 = sshll.u32 [#allocation6], 4
      %s40 = int_to_ptr.vmem [resolvable:$true] %s39
      %42 = dma.hbm_to_vmem [thread:$0]  %s1, 128, %s40, [#allocation7]
    $region9: #{tpu_custom_call.1} parent=1 // pred_fallthru
      _
    // Predicated region
    $region10: #{tpu_custom_call.1} parent=1 // pred_check
      _
    $region11: #{tpu_custom_call.1} parent=1 // pred_check_branch
      %44 = sbr.rel (0) target = $region13
    $region12: #{tpu_custom_call.1} parent=1 // pred_region
      %s46 = ssub.s32 512, 512
      %47 = vsyncadd [#allocation7], %s46
      %s48 = sshll.u32 [#allocation8], 4
      %s49 = int_to_ptr.vmem [resolvable:$true] %s48
      %54 = dma.hbm_to_vmem [thread:$0]  %s2, 512, %s49, [#allocation7], 256, 256, 16
    $region13: #{tpu_custom_call.1} parent=1 // pred_fallthru
      _
    // Predicated region
    $region14: #{tpu_custom_call.1} parent=1 // pred_check
      _
    $region15: #{tpu_custom_call.1} parent=1 // pred_check_branch
      %56 = sbr.rel (0) target = $region17
    $region16: #{tpu_custom_call.1} parent=1 // pred_region
      %s58 = ssub.s32 256, 256
      %59 = vsyncadd [#allocation10], %s58
      %s61 = sshll.u32 [#allocation9], 4
      %s62 = int_to_ptr.vmem [resolvable:$true] %s61
      %64 = dma.hbm_to_vmem [thread:$0]  %s3, 256, %s62, [#allocation10]
    $region17: #{tpu_custom_call.1} parent=1 // pred_fallthru
      _
    // Predicated region
    $region18: #{tpu_custom_call.1} parent=1 // pred_check
      _
    $region19: #{tpu_custom_call.1} parent=1 // pred_check_branch
      %66 = sbr.rel (0) target = $region21
    $region20: #{tpu_custom_call.1} parent=1 // pred_region
      _
    $region21: #{tpu_custom_call.1} parent=1 // pred_fallthru
      _
    // Predicated region
    $region22: #{tpu_custom_call.1} parent=1 // pred_check
      _
    $region23: #{tpu_custom_call.1} parent=1 // pred_check_branch
      %68 = sbr.rel (0) target = $region25
    $region24: #{tpu_custom_call.1} parent=1 // pred_region
      %s70 = ssub.s32 4096, 4096
      %71 = vsyncadd [#allocation10], %s70
      %s72 = sshll.u32 [#allocation11], 4
      %s73 = int_to_ptr.vmem [resolvable:$true] %s72
      %78 = dma.hbm_to_vmem [thread:$0]  %s5, 4096, %s73, [#allocation10], 128, 128, 8
    $region25: #{tpu_custom_call.1} parent=1 // pred_fallthru
      _
    // Predicated region
    $region26: #{tpu_custom_call.1} parent=1 // pred_check
      _
    $region27: #{tpu_custom_call.1} parent=1 // pred_check_branch
      %80 = sbr.rel (0) target = $region29
    $region28: #{tpu_custom_call.1} parent=1 // pred_region
      _
    $region29: #{tpu_custom_call.1} parent=1 // pred_fallthru
      _
    // Predicated region
    $region30: #{tpu_custom_call.1} parent=1 // pred_check
      _
    $region31: #{tpu_custom_call.1} parent=1 // pred_check_branch
      %82 = sbr.rel (0) target = $region33
    $region32: #{tpu_custom_call.1} parent=1 // pred_region
      %s84 = ssub.s32 4096, 4096
      %85 = vsyncadd [#allocation13], %s84
      %s86 = sshll.u32 [#allocation12], 4
      %s87 = int_to_ptr.vmem [resolvable:$true] %s86
      %92 = dma.hbm_to_vmem [thread:$0]  %s7, 4096, %s87, [#allocation13], 128, 128, 8
    $region33: #{tpu_custom_call.1} parent=1 // pred_fallthru
      _
    // Predicated region
    $region34: #{tpu_custom_call.1} parent=1 // pred_check
      _
    $region35: #{tpu_custom_call.1} parent=1 // pred_check_branch
      %94 = sbr.rel (0) target = $region37
    $region36: #{tpu_custom_call.1} parent=1 // pred_region
      _
    $region37: #{tpu_custom_call.1} parent=1 // pred_fallthru
      _
    // Predicated region
    $region38: #{tpu_custom_call.1} parent=1 // pred_check
      _
    $region39: #{tpu_custom_call.1} parent=1 // pred_check_branch
      %96 = sbr.rel (0) target = $region41
    $region40: #{tpu_custom_call.1} parent=1 // pred_region
      _
    $region41: #{tpu_custom_call.1} parent=1 // pred_fallthru
      _
    // Predicated region
    $region42: #{tpu_custom_call.1} parent=1 // pred_check
      _
    $region43: #{tpu_custom_call.1} parent=1 // pred_check_branch
      %98 = sbr.rel (0) target = $region45
    $region44: #{tpu_custom_call.1} parent=1 // pred_region
      _
    $region45: #{tpu_custom_call.1} parent=1 // pred_fallthru
      _
    // Predicated region
    $region46: #{tpu_custom_call.1} parent=1 // pred_check
      _
    $region47: #{tpu_custom_call.1} parent=1 // pred_check_branch
      %100 = sbr.rel (0) target = $region49
    $region48: #{tpu_custom_call.1} parent=1 // pred_region
      %101 = dma.done [#allocation4], 128
    $region49: #{tpu_custom_call.1} parent=1 // pred_fallthru
      _
    // Predicated region
    $region50: #{tpu_custom_call.1} parent=1 // pred_check
      _
    $region51: #{tpu_custom_call.1} parent=1 // pred_check_branch
      %103 = sbr.rel (0) target = $region53
    $region52: #{tpu_custom_call.1} parent=1 // pred_region
      %104 = dma.done [#allocation7], 128
    $region53: #{tpu_custom_call.1} parent=1 // pred_fallthru
      _
    // Predicated region
    $region54: #{tpu_custom_call.1} parent=1 // pred_check
      _
    $region55: #{tpu_custom_call.1} parent=1 // pred_check_branch
      %106 = sbr.rel (0) target = $region57
    $region56: #{tpu_custom_call.1} parent=1 // pred_region
      %107 = dma.done [#allocation7], 512
    $region57: #{tpu_custom_call.1} parent=1 // pred_fallthru
      _
    // Predicated region
    $region58: #{tpu_custom_call.1} parent=1 // pred_check
      _
    $region59: #{tpu_custom_call.1} parent=1 // pred_check_branch
      %109 = sbr.rel (0) target = $region61
    $region60: #{tpu_custom_call.1} parent=1 // pred_region
      %110 = dma.done [#allocation10], 256
    $region61: #{tpu_custom_call.1} parent=1 // pred_fallthru
      _
    // Predicated region
    $region62: #{tpu_custom_call.1} parent=1 // pred_check
      _
    $region63: #{tpu_custom_call.1} parent=1 // pred_check_branch
      %112 = sbr.rel (0) target = $region65
    $region64: #{tpu_custom_call.1} parent=1 // pred_region
      %113 = dma.done [#allocation10], 4096
    $region65: #{tpu_custom_call.1} parent=1 // pred_fallthru
      _
    // Predicated region
    $region66: #{tpu_custom_call.1} parent=1 // pred_check
      _
    $region67: #{tpu_custom_call.1} parent=1 // pred_check_branch
      %115 = sbr.rel (0) target = $region69
    $region68: #{tpu_custom_call.1} parent=1 // pred_region
      %116 = dma.done [#allocation13], 4096
    $region69: #{tpu_custom_call.1} parent=1 // pred_fallthru
      _
    %v117 = vld [vmem:[#allocation3] sm:$0xff]
    %v118 = vld [vmem:[#allocation8] sm:$0xff]
    %v119 = vld [vmem:[#allocation8 + $0x8] sm:$0xff]
    %v120 = vld [vmem:[#allocation8 + $0x10] sm:$0xff]
    %v121 = vld [vmem:[#allocation8 + $0x18] sm:$0xff]
    %v122 = vld [vmem:[#allocation6] sm:$0xff]
    %v123 = vld [vmem:[#allocation9] sm:$0xff]
    %v124 = vld [vmem:[#allocation9 + $0x8] sm:$0xff]
    %vm125 = vcmask 64512
    %v127 = vsel %vm125, %v122, 0
    %129 = vmatprep.subr.mxu0 0.0
    %130 = vmatpush1.msra.mxu0 0.0
    %131 = vmatprep.subr.mxu0 0.0
    %132 = vmatpush1.msra.mxu0 0.0
    %133 = vmatprep.subr.mxu0 0.0
    %134 = vmatpush1.msra.mxu0 0.0
    %135 = vmatprep.subr.mxu0 0.0
    %136 = vmatpush1.msra.mxu0 0.0
    %137 = vmatprep.subr.mxu0 0.0
    %138 = vmatpush1.msra.mxu0 0.0
    %139 = vmatprep.subr.mxu0 0.0
    %140 = vmatpush1.msra.mxu0 0.0
    %141 = vmatprep.subr.mxu0 0.0
    %142 = vmatpush1.msra.mxu0 0.0
    %143 = vmatprep.subr.mxu0 0.0
    %144 = vmatpush1.msra.mxu0 0.0
    %145 = vmatprep.subr.mxu0 0.0
    %146 = vmatpush1.msra.mxu0 0.0
    %147 = vmatprep.subr.mxu0 0.0
    %148 = vmatpush1.msra.mxu0 0.0
    %149 = vmatprep.subr.mxu0 0.0
    %150 = vmatpush1.msra.mxu0 0.0
    %151 = vmatprep.subr.mxu0 0.0
    %152 = vmatpush1.msra.mxu0 0.0
    %153 = vmatprep.subr.mxu0 0.0
    %154 = vmatpush1.msra.mxu0 0.0
    %155 = vmatprep.subr.mxu0 0.0
    %156 = vmatpush1.msra.mxu0 0.0
    %157 = vmatprep.subr.mxu0 0.0
    %158 = vmatpush1.msra.mxu0 0.0
    %159 = vmatprep.subr.mxu0 %v124
    %160 = vmatpush1.msra.mxu0 %v123
    %161 = vmatprep.subr.mxu0 0.0
    %162 = vmatpush2.msra.mxu0 0.0
    %163 = vmatprep.subr.mxu0 0.0
    %164 = vmatpush2.msra.mxu0 0.0
    %165 = vmatprep.subr.mxu0 0.0
    %166 = vmatpush2.msra.mxu0 0.0
    %167 = vmatprep.subr.mxu0 0.0
    %168 = vmatpush2.msra.mxu0 0.0
    %169 = vmatprep.subr.mxu0 0.0
    %170 = vmatpush2.msra.mxu0 0.0
    %171 = vmatprep.subr.mxu0 0.0
    %172 = vmatpush2.msra.mxu0 0.0
    %173 = vmatprep.subr.mxu0 0.0
    %174 = vmatpush2.msra.mxu0 0.0
    %175 = vmatprep.subr.mxu0 0.0
    %176 = vmatpush2.msra.mxu0 0.0
    %177 = vmatprep.subr.mxu0 0.0
    %178 = vmatpush2.msra.mxu0 0.0
    %179 = vmatprep.subr.mxu0 0.0
    %180 = vmatpush2.msra.mxu0 0.0
    %181 = vmatprep.subr.mxu0 0.0
    %182 = vmatpush2.msra.mxu0 0.0
    %183 = vmatprep.subr.mxu0 0.0
    %184 = vmatpush2.msra.mxu0 0.0
    %185 = vmatprep.subr.mxu0 0.0
    %186 = vmatpush2.msra.mxu0 0.0
    %187 = vmatprep.subr.mxu0 0.0
    %188 = vmatpush2.msra.mxu0 0.0
    %189 = vmatprep.subr.mxu0 0.0
    %190 = vmatpush2.msra.mxu0 0.0
    %191 = vmatprep.subr.mxu0 0.0
    %192 = vmatpush2.msra.mxu0 0.0
    %193 = vmatprep.mubr.f32.mxu0 0.0
    %194 = vmatmul.mubr.f32.gmra.mxu0 %v127
    %v195 = vpop.f32.mrf.mxu0
    %v196 = vadd.f32 0.0, %v195
    %v197 = vpop.f32.mrf.mxu0
    %v198 = vadd.f32 0.0, %v197
    %199 = vdwg.mxu0
    %vm200 = vcmask 130048
    %v202 = vsel %vm200, %v117, 0
    %204 = vmatprep.subr.mxu0 0.0
    %205 = vmatpush1.msra.mxu0 0.0
    %206 = vmatprep.subr.mxu0 0.0
    %207 = vmatpush1.msra.mxu0 0.0
    %208 = vmatprep.subr.mxu0 0.0
    %209 = vmatpush1.msra.mxu0 0.0
    %210 = vmatprep.subr.mxu0 0.0
    %211 = vmatpush1.msra.mxu0 0.0
    %212 = vmatprep.subr.mxu0 0.0
    %213 = vmatpush1.msra.mxu0 0.0
    %214 = vmatprep.subr.mxu0 0.0
    %215 = vmatpush1.msra.mxu0 0.0
    %216 = vmatprep.subr.mxu0 0.0
    %217 = vmatpush1.msra.mxu0 0.0
    %218 = vmatprep.subr.mxu0 0.0
    %219 = vmatpush1.msra.mxu0 0.0
    %220 = vmatprep.subr.mxu0 0.0
    %221 = vmatpush1.msra.mxu0 0.0
    %222 = vmatprep.subr.mxu0 0.0
    %223 = vmatpush1.msra.mxu0 0.0
    %224 = vmatprep.subr.mxu0 0.0
    %225 = vmatpush1.msra.mxu0 0.0
    %226 = vmatprep.subr.mxu0 0.0
    %227 = vmatpush1.msra.mxu0 0.0
    %228 = vmatprep.subr.mxu0 0.0
    %229 = vmatpush1.msra.mxu0 0.0
    %230 = vmatprep.subr.mxu0 0.0
    %231 = vmatpush1.msra.mxu0 0.0
    %232 = vmatprep.subr.mxu0 %v121
    %233 = vmatpush1.msra.mxu0 %v120
    %234 = vmatprep.subr.mxu0 %v119
    %235 = vmatpush1.msra.mxu0 %v118
    %236 = vmatprep.subr.mxu0 0.0
    %237 = vmatpush2.msra.mxu0 0.0
    %238 = vmatprep.subr.mxu0 0.0
    %239 = vmatpush2.msra.mxu0 0.0
    %240 = vmatprep.subr.mxu0 0.0
    %241 = vmatpush2.msra.mxu0 0.0
    %242 = vmatprep.subr.mxu0 0.0
    %243 = vmatpush2.msra.mxu0 0.0
    %244 = vmatprep.subr.mxu0 0.0
    %245 = vmatpush2.msra.mxu0 0.0
    %246 = vmatprep.subr.mxu0 0.0
    %247 = vmatpush2.msra.mxu0 0.0
    %248 = vmatprep.subr.mxu0 0.0
    %249 = vmatpush2.msra.mxu0 0.0
    %250 = vmatprep.subr.mxu0 0.0
    %251 = vmatpush2.msra.mxu0 0.0
    %252 = vmatprep.subr.mxu0 0.0
    %253 = vmatpush2.msra.mxu0 0.0
    %254 = vmatprep.subr.mxu0 0.0
    %255 = vmatpush2.msra.mxu0 0.0
    %256 = vmatprep.subr.mxu0 0.0
    %257 = vmatpush2.msra.mxu0 0.0
    %258 = vmatprep.subr.mxu0 0.0
    %259 = vmatpush2.msra.mxu0 0.0
    %260 = vmatprep.subr.mxu0 0.0
    %261 = vmatpush2.msra.mxu0 0.0
    %262 = vmatprep.subr.mxu0 0.0
    %263 = vmatpush2.msra.mxu0 0.0
    %264 = vmatprep.subr.mxu0 0.0
    %265 = vmatpush2.msra.mxu0 0.0
    %266 = vmatprep.subr.mxu0 0.0
    %267 = vmatpush2.msra.mxu0 0.0
    %268 = vmatprep.mubr.f32.mxu0 0.0
    %269 = vmatmul.mubr.f32.gmra.mxu0 %v202
    %v270 = vpop.f32.mrf.mxu0
    %v271 = vadd.f32 %v196, %v270
    %v272 = vpop.f32.mrf.mxu0
    %v273 = vadd.f32 %v198, %v272
    %274 = vdwg.mxu0
    %v275 = vld [vmem:[%s4] sm:$0x3]
    %v277 = vlaneseq
    %v278 = vshrl.u32 %v277, 7
    %v279 = vsub.s32 0, %v278
    %v280 = vrot.slane %v275, %v279
    %v281 = vlaneseq
    %v282 = vshrl.u32 %v281, 7
    %v283 = vsub.s32 1, %v282
    %v284 = vrot.slane %v275, %v283
    %v287 = vadd.f32 %v271, %v280
    %v288 = vadd.f32 %v273, %v284
    %v289 = vtanh.pop %v287
    %v290 = vtanh.pop %v288
    %v291 = vpack.c.bf16 %v289, %v289
    %v292 = vpack.c.bf16 %v290, %v290
    %v293 = vld [vmem:[#allocation11] sm:$0xff]
    %v294 = vld [vmem:[#allocation11 + $0x8] sm:$0xff]
    %v295 = vld [vmem:[#allocation11 + $0x10] sm:$0xff]
    %v296 = vld [vmem:[#allocation11 + $0x18] sm:$0xff]
    %v297 = vld [vmem:[#allocation11 + $0x20] sm:$0xff]
    %v298 = vld [vmem:[#allocation11 + $0x28] sm:$0xff]
    %v299 = vld [vmem:[#allocation11 + $0x30] sm:$0xff]
    %v300 = vld [vmem:[#allocation11 + $0x38] sm:$0xff]
    %v301 = vld [vmem:[#allocation11 + $0x40] sm:$0xff]
    %v302 = vld [vmem:[#allocation11 + $0x48] sm:$0xff]
    %v303 = vld [vmem:[#allocation11 + $0x50] sm:$0xff]
    %v304 = vld [vmem:[#allocation11 + $0x58] sm:$0xff]
    %v305 = vld [vmem:[#allocation11 + $0x60] sm:$0xff]
    %v306 = vld [vmem:[#allocation11 + $0x68] sm:$0xff]
    %v307 = vld [vmem:[#allocation11 + $0x70] sm:$0xff]
    %v308 = vld [vmem:[#allocation11 + $0x78] sm:$0xff]
    %v309 = vld [vmem:[#allocation11 + $0x80] sm:$0xff]
    %v310 = vld [vmem:[#allocation11 + $0x88] sm:$0xff]
    %v311 = vld [vmem:[#allocation11 + $0x90] sm:$0xff]
    %v312 = vld [vmem:[#allocation11 + $0x98] sm:$0xff]
    %v313 = vld [vmem:[#allocation11 + $0xa0] sm:$0xff]
    %v314 = vld [vmem:[#allocation11 + $0xa8] sm:$0xff]
    %v315 = vld [vmem:[#allocation11 + $0xb0] sm:$0xff]
    %v316 = vld [vmem:[#allocation11 + $0xb8] sm:$0xff]
    %v317 = vld [vmem:[#allocation11 + $0xc0] sm:$0xff]
    %v318 = vld [vmem:[#allocation11 + $0xc8] sm:$0xff]
    %v319 = vld [vmem:[#allocation11 + $0xd0] sm:$0xff]
    %v320 = vld [vmem:[#allocation11 + $0xd8] sm:$0xff]
    %v321 = vld [vmem:[#allocation11 + $0xe0] sm:$0xff]
    %v322 = vld [vmem:[#allocation11 + $0xe8] sm:$0xff]
    %v323 = vld [vmem:[#allocation11 + $0xf0] sm:$0xff]
    %v324 = vld [vmem:[#allocation11 + $0xf8] sm:$0xff]
    %v325 = vld [vmem:[%s6] sm:$0x3]
    %v327 = vlaneseq
    %v328 = vshrl.u32 %v327, 7
    %v329 = vsub.s32 0, %v328
    %v330 = vrot.slane %v325, %v329
    %v331 = vlaneseq
    %v332 = vshrl.u32 %v331, 7
    %v333 = vsub.s32 1, %v332
    %v334 = vrot.slane %v325, %v333
    %v369 = vunpack.c.l.b16 %v293
    %v370 = vunpack.c.h.b16 %v293
    %v371 = vunpack.c.l.b16 %v294
    %v372 = vunpack.c.h.b16 %v294
    %v373 = vunpack.c.l.b16 %v295
    %v374 = vunpack.c.h.b16 %v295
    %v375 = vunpack.c.l.b16 %v296
    %v376 = vunpack.c.h.b16 %v296
    %v377 = vunpack.c.l.b16 %v297
    %v378 = vunpack.c.h.b16 %v297
    %v379 = vunpack.c.l.b16 %v298
    %v380 = vunpack.c.h.b16 %v298
    %v381 = vunpack.c.l.b16 %v299
    %v382 = vunpack.c.h.b16 %v299
    %v383 = vunpack.c.l.b16 %v300
    %v384 = vunpack.c.h.b16 %v300
    %v385 = vunpack.c.l.b16 %v301
    %v386 = vunpack.c.h.b16 %v301
    %v387 = vunpack.c.l.b16 %v302
    %v388 = vunpack.c.h.b16 %v302
    %v389 = vunpack.c.l.b16 %v303
    %v390 = vunpack.c.h.b16 %v303
    %v391 = vunpack.c.l.b16 %v304
    %v392 = vunpack.c.h.b16 %v304
    %v393 = vunpack.c.l.b16 %v305
    %v394 = vunpack.c.h.b16 %v305
    %v395 = vunpack.c.l.b16 %v306
    %v396 = vunpack.c.h.b16 %v306
    %v397 = vunpack.c.l.b16 %v307
    %v398 = vunpack.c.h.b16 %v307
    %v399 = vunpack.c.l.b16 %v308
    %v400 = vunpack.c.h.b16 %v308
    %v401 = vunpack.c.l.b16 %v309
    %v402 = vunpack.c.h.b16 %v309
    %v403 = vunpack.c.l.b16 %v310
    %v404 = vunpack.c.h.b16 %v310
    %v405 = vunpack.c.l.b16 %v311
    %v406 = vunpack.c.h.b16 %v311
    %v407 = vunpack.c.l.b16 %v312
    %v408 = vunpack.c.h.b16 %v312
    %v409 = vunpack.c.l.b16 %v313
    %v410 = vunpack.c.h.b16 %v313
    %v411 = vunpack.c.l.b16 %v314
    %v412 = vunpack.c.h.b16 %v314
    %v413 = vunpack.c.l.b16 %v315
    %v414 = vunpack.c.h.b16 %v315
    %v415 = vunpack.c.l.b16 %v316
    %v416 = vunpack.c.h.b16 %v316
    %v417 = vunpack.c.l.b16 %v317
    %v418 = vunpack.c.h.b16 %v317
    %v419 = vunpack.c.l.b16 %v318
    %v420 = vunpack.c.h.b16 %v318
    %v421 = vunpack.c.l.b16 %v319
    %v422 = vunpack.c.h.b16 %v319
    %v423 = vunpack.c.l.b16 %v320
    %v424 = vunpack.c.h.b16 %v320
    %v425 = vunpack.c.l.b16 %v321
    %v426 = vunpack.c.h.b16 %v321
    %v427 = vunpack.c.l.b16 %v322
    %v428 = vunpack.c.h.b16 %v322
    %v429 = vunpack.c.l.b16 %v323
    %v430 = vunpack.c.h.b16 %v323
    %v431 = vunpack.c.l.b16 %v324
    %v432 = vunpack.c.h.b16 %v324
    %v433 = vpack.c.b16 %v371, %v369
    %v434 = vpack.c.b16 %v372, %v370
    %v435 = vpack.c.b16 %v375, %v373
    %v436 = vpack.c.b16 %v376, %v374
    %v437 = vpack.c.b16 %v379, %v377
    %v438 = vpack.c.b16 %v380, %v378
    %v439 = vpack.c.b16 %v383, %v381
    %v440 = vpack.c.b16 %v384, %v382
    %v441 = vpack.c.b16 %v387, %v385
    %v442 = vpack.c.b16 %v388, %v386
    %v443 = vpack.c.b16 %v391, %v389
    %v444 = vpack.c.b16 %v392, %v390
    %v445 = vpack.c.b16 %v395, %v393
    %v446 = vpack.c.b16 %v396, %v394
    %v447 = vpack.c.b16 %v399, %v397
    %v448 = vpack.c.b16 %v400, %v398
    %v449 = vpack.c.b16 %v403, %v401
    %v450 = vpack.c.b16 %v404, %v402
    %v451 = vpack.c.b16 %v407, %v405
    %v452 = vpack.c.b16 %v408, %v406
    %v453 = vpack.c.b16 %v411, %v409
    %v454 = vpack.c.b16 %v412, %v410
    %v455 = vpack.c.b16 %v415, %v413
    %v456 = vpack.c.b16 %v416, %v414
    %v457 = vpack.c.b16 %v419, %v417
    %v458 = vpack.c.b16 %v420, %v418
    %v459 = vpack.c.b16 %v423, %v421
    %v460 = vpack.c.b16 %v424, %v422
    %v461 = vpack.c.b16 %v427, %v425
    %v462 = vpack.c.b16 %v428, %v426
    %v463 = vpack.c.b16 %v431, %v429
    %v464 = vpack.c.b16 %v432, %v430
    %497 = vmatprep.subr.bf16.mxu0 %v448
    %498 = vmatpush1.bf16.msra.mxu0 %v447
    %499 = vmatprep.subr.bf16.mxu0 %v446
    %500 = vmatpush1.bf16.msra.mxu0 %v445
    %501 = vmatprep.subr.bf16.mxu0 %v444
    %502 = vmatpush1.bf16.msra.mxu0 %v443
    %503 = vmatprep.subr.bf16.mxu0 %v442
    %504 = vmatpush1.bf16.msra.mxu0 %v441
    %505 = vmatprep.subr.bf16.mxu0 %v440
    %506 = vmatpush1.bf16.msra.mxu0 %v439
    %507 = vmatprep.subr.bf16.mxu0 %v438
    %508 = vmatpush1.bf16.msra.mxu0 %v437
    %509 = vmatprep.subr.bf16.mxu0 %v436
    %510 = vmatpush1.bf16.msra.mxu0 %v435
    %511 = vmatprep.subr.bf16.mxu0 %v434
    %512 = vmatpush1.bf16.msra.mxu0 %v433
    %513 = vmatprep.subr.bf16.mxu0 %v464
    %514 = vmatpush2.bf16.msra.mxu0 %v463
    %515 = vmatprep.subr.bf16.mxu0 %v462
    %516 = vmatpush2.bf16.msra.mxu0 %v461
    %517 = vmatprep.subr.bf16.mxu0 %v460
    %518 = vmatpush2.bf16.msra.mxu0 %v459
    %519 = vmatprep.subr.bf16.mxu0 %v458
    %520 = vmatpush2.bf16.msra.mxu0 %v457
    %521 = vmatprep.subr.bf16.mxu0 %v456
    %522 = vmatpush2.bf16.msra.mxu0 %v455
    %523 = vmatprep.subr.bf16.mxu0 %v454
    %524 = vmatpush2.bf16.msra.mxu0 %v453
    %525 = vmatprep.subr.bf16.mxu0 %v452
    %526 = vmatpush2.bf16.msra.mxu0 %v451
    %527 = vmatprep.subr.bf16.mxu0 %v450
    %528 = vmatpush2.bf16.msra.mxu0 %v449
    %529 = vmatprep.mubr.bf16.mxu0 %v292
    %530 = vmatmul.mubr.bf16.gmra.mxu0 %v291
    %v531 = vpop.f32.mrf.mxu0
    %v532 = vadd.f32 %v330, %v531
    %v533 = vpop.f32.mrf.mxu0
    %v534 = vadd.f32 %v334, %v533
    %v535 = vpop.f32.mrf.mxu0
    %v536 = vpop.f32.mrf.mxu0
    %537 = vdwg.mxu0
    %v538 = vtanh.pop %v532
    %v539 = vtanh.pop %v534
    %v540 = vpack.c.bf16 %v538, %v538
    %v541 = vpack.c.bf16 %v539, %v539
    %v542 = vld [vmem:[#allocation12] sm:$0xff]
    %v543 = vld [vmem:[#allocation12 + $0x8] sm:$0xff]
    %v544 = vld [vmem:[#allocation12 + $0x10] sm:$0xff]
    %v545 = vld [vmem:[#allocation12 + $0x18] sm:$0xff]
    %v546 = vld [vmem:[#allocation12 + $0x20] sm:$0xff]
    %v547 = vld [vmem:[#allocation12 + $0x28] sm:$0xff]
    %v548 = vld [vmem:[#allocation12 + $0x30] sm:$0xff]
    %v549 = vld [vmem:[#allocation12 + $0x38] sm:$0xff]
    %v550 = vld [vmem:[#allocation12 + $0x40] sm:$0xff]
    %v551 = vld [vmem:[#allocation12 + $0x48] sm:$0xff]
    %v552 = vld [vmem:[#allocation12 + $0x50] sm:$0xff]
    %v553 = vld [vmem:[#allocation12 + $0x58] sm:$0xff]
    %v554 = vld [vmem:[#allocation12 + $0x60] sm:$0xff]
    %v555 = vld [vmem:[#allocation12 + $0x68] sm:$0xff]
    %v556 = vld [vmem:[#allocation12 + $0x70] sm:$0xff]
    %v557 = vld [vmem:[#allocation12 + $0x78] sm:$0xff]
    %v558 = vld [vmem:[#allocation12 + $0x80] sm:$0xff]
    %v559 = vld [vmem:[#allocation12 + $0x88] sm:$0xff]
    %v560 = vld [vmem:[#allocation12 + $0x90] sm:$0xff]
    %v561 = vld [vmem:[#allocation12 + $0x98] sm:$0xff]
    %v562 = vld [vmem:[#allocation12 + $0xa0] sm:$0xff]
    %v563 = vld [vmem:[#allocation12 + $0xa8] sm:$0xff]
    %v564 = vld [vmem:[#allocation12 + $0xb0] sm:$0xff]
    %v565 = vld [vmem:[#allocation12 + $0xb8] sm:$0xff]
    %v566 = vld [vmem:[#allocation12 + $0xc0] sm:$0xff]
    %v567 = vld [vmem:[#allocation12 + $0xc8] sm:$0xff]
    %v568 = vld [vmem:[#allocation12 + $0xd0] sm:$0xff]
    %v569 = vld [vmem:[#allocation12 + $0xd8] sm:$0xff]
    %v570 = vld [vmem:[#allocation12 + $0xe0] sm:$0xff]
    %v571 = vld [vmem:[#allocation12 + $0xe8] sm:$0xff]
    %v572 = vld [vmem:[#allocation12 + $0xf0] sm:$0xff]
    %v573 = vld [vmem:[#allocation12 + $0xf8] sm:$0xff]
    %v574 = vld [vmem:[%s8] sm:$0x3]
    %v576 = vlaneseq
    %v577 = vshrl.u32 %v576, 7
    %v578 = vsub.s32 0, %v577
    %v579 = vrot.slane %v574, %v578
    %v580 = vlaneseq
    %v581 = vshrl.u32 %v580, 7
    %v582 = vsub.s32 1, %v581
    %v583 = vrot.slane %v574, %v582
    %v618 = vunpack.c.l.b16 %v542
    %v619 = vunpack.c.h.b16 %v542
    %v620 = vunpack.c.l.b16 %v543
    %v621 = vunpack.c.h.b16 %v543
    %v622 = vunpack.c.l.b16 %v544
    %v623 = vunpack.c.h.b16 %v544
    %v624 = vunpack.c.l.b16 %v545
    %v625 = vunpack.c.h.b16 %v545
    %v626 = vunpack.c.l.b16 %v546
    %v627 = vunpack.c.h.b16 %v546
    %v628 = vunpack.c.l.b16 %v547
    %v629 = vunpack.c.h.b16 %v547
    %v630 = vunpack.c.l.b16 %v548
    %v631 = vunpack.c.h.b16 %v548
    %v632 = vunpack.c.l.b16 %v549
    %v633 = vunpack.c.h.b16 %v549
    %v634 = vunpack.c.l.b16 %v550
    %v635 = vunpack.c.h.b16 %v550
    %v636 = vunpack.c.l.b16 %v551
    %v637 = vunpack.c.h.b16 %v551
    %v638 = vunpack.c.l.b16 %v552
    %v639 = vunpack.c.h.b16 %v552
    %v640 = vunpack.c.l.b16 %v553
    %v641 = vunpack.c.h.b16 %v553
    %v642 = vunpack.c.l.b16 %v554
    %v643 = vunpack.c.h.b16 %v554
    %v644 = vunpack.c.l.b16 %v555
    %v645 = vunpack.c.h.b16 %v555
    %v646 = vunpack.c.l.b16 %v556
    %v647 = vunpack.c.h.b16 %v556
    %v648 = vunpack.c.l.b16 %v557
    %v649 = vunpack.c.h.b16 %v557
    %v650 = vunpack.c.l.b16 %v558
    %v651 = vunpack.c.h.b16 %v558
    %v652 = vunpack.c.l.b16 %v559
    %v653 = vunpack.c.h.b16 %v559
    %v654 = vunpack.c.l.b16 %v560
    %v655 = vunpack.c.h.b16 %v560
    %v656 = vunpack.c.l.b16 %v561
    %v657 = vunpack.c.h.b16 %v561
    %v658 = vunpack.c.l.b16 %v562
    %v659 = vunpack.c.h.b16 %v562
    %v660 = vunpack.c.l.b16 %v563
    %v661 = vunpack.c.h.b16 %v563
    %v662 = vunpack.c.l.b16 %v564
    %v663 = vunpack.c.h.b16 %v564
    %v664 = vunpack.c.l.b16 %v565
    %v665 = vunpack.c.h.b16 %v565
    %v666 = vunpack.c.l.b16 %v566
    %v667 = vunpack.c.h.b16 %v566
    %v668 = vunpack.c.l.b16 %v567
    %v669 = vunpack.c.h.b16 %v567
    %v670 = vunpack.c.l.b16 %v568
    %v671 = vunpack.c.h.b16 %v568
    %v672 = vunpack.c.l.b16 %v569
    %v673 = vunpack.c.h.b16 %v569
    %v674 = vunpack.c.l.b16 %v570
    %v675 = vunpack.c.h.b16 %v570
    %v676 = vunpack.c.l.b16 %v571
    %v677 = vunpack.c.h.b16 %v571
    %v678 = vunpack.c.l.b16 %v572
    %v679 = vunpack.c.h.b16 %v572
    %v680 = vunpack.c.l.b16 %v573
    %v681 = vunpack.c.h.b16 %v573
    %v682 = vpack.c.b16 %v620, %v618
    %v683 = vpack.c.b16 %v621, %v619
    %v684 = vpack.c.b16 %v624, %v622
    %v685 = vpack.c.b16 %v625, %v623
    %v686 = vpack.c.b16 %v628, %v626
    %v687 = vpack.c.b16 %v629, %v627
    %v688 = vpack.c.b16 %v632, %v630
    %v689 = vpack.c.b16 %v633, %v631
    %v690 = vpack.c.b16 %v636, %v634
    %v691 = vpack.c.b16 %v637, %v635
    %v692 = vpack.c.b16 %v640, %v638
    %v693 = vpack.c.b16 %v641, %v639
    %v694 = vpack.c.b16 %v644, %v642
    %v695 = vpack.c.b16 %v645, %v643
    %v696 = vpack.c.b16 %v648, %v646
    %v697 = vpack.c.b16 %v649, %v647
    %v698 = vpack.c.b16 %v652, %v650
    %v699 = vpack.c.b16 %v653, %v651
    %v700 = vpack.c.b16 %v656, %v654
    %v701 = vpack.c.b16 %v657, %v655
    %v702 = vpack.c.b16 %v660, %v658
    %v703 = vpack.c.b16 %v661, %v659
    %v704 = vpack.c.b16 %v664, %v662
    %v705 = vpack.c.b16 %v665, %v663
    %v706 = vpack.c.b16 %v668, %v666
    %v707 = vpack.c.b16 %v669, %v667
    %v708 = vpack.c.b16 %v672, %v670
    %v709 = vpack.c.b16 %v673, %v671
    %v710 = vpack.c.b16 %v676, %v674
    %v711 = vpack.c.b16 %v677, %v675
    %v712 = vpack.c.b16 %v680, %v678
    %v713 = vpack.c.b16 %v681, %v679
    %746 = vmatprep.subr.bf16.mxu0 %v697
    %747 = vmatpush1.bf16.msra.mxu0 %v696
    %748 = vmatprep.subr.bf16.mxu0 %v695
    %749 = vmatpush1.bf16.msra.mxu0 %v694
    %750 = vmatprep.subr.bf16.mxu0 %v693
    %751 = vmatpush1.bf16.msra.mxu0 %v692
    %752 = vmatprep.subr.bf16.mxu0 %v691
    %753 = vmatpush1.bf16.msra.mxu0 %v690
    %754 = vmatprep.subr.bf16.mxu0 %v689
    %755 = vmatpush1.bf16.msra.mxu0 %v688
    %756 = vmatprep.subr.bf16.mxu0 %v687
    %757 = vmatpush1.bf16.msra.mxu0 %v686
    %758 = vmatprep.subr.bf16.mxu0 %v685
    %759 = vmatpush1.bf16.msra.mxu0 %v684
    %760 = vmatprep.subr.bf16.mxu0 %v683
    %761 = vmatpush1.bf16.msra.mxu0 %v682
    %762 = vmatprep.subr.bf16.mxu0 %v713
    %763 = vmatpush2.bf16.msra.mxu0 %v712
    %764 = vmatprep.subr.bf16.mxu0 %v711
    %765 = vmatpush2.bf16.msra.mxu0 %v710
    %766 = vmatprep.subr.bf16.mxu0 %v709
    %767 = vmatpush2.bf16.msra.mxu0 %v708
    %768 = vmatprep.subr.bf16.mxu0 %v707
    %769 = vmatpush2.bf16.msra.mxu0 %v706
    %770 = vmatprep.subr.bf16.mxu0 %v705
    %771 = vmatpush2.bf16.msra.mxu0 %v704
    %772 = vmatprep.subr.bf16.mxu0 %v703
    %773 = vmatpush2.bf16.msra.mxu0 %v702
    %774 = vmatprep.subr.bf16.mxu0 %v701
    %775 = vmatpush2.bf16.msra.mxu0 %v700
    %776 = vmatprep.subr.bf16.mxu0 %v699
    %777 = vmatpush2.bf16.msra.mxu0 %v698
    %778 = vmatprep.mubr.bf16.mxu0 %v541
    %779 = vmatmul.mubr.bf16.gmra.mxu0 %v540
    %v780 = vpop.f32.mrf.mxu0
    %v781 = vadd.f32 %v579, %v780
    %v782 = vpop.f32.mrf.mxu0
    %v783 = vadd.f32 %v583, %v782
    %v784 = vpop.f32.mrf.mxu0
    %v785 = vpop.f32.mrf.mxu0
    %786 = vdwg.mxu0
    %v787 = vtanh.pop %v781
    %v788 = vtanh.pop %v783
    %v789 = vld [vmem:[%s9] sm:$0x3]
    %v790 = vld [vmem:[#allocation2] sm:$0x1]
    %792 = vset.pattern.permute.xlu0 0
    %793 = vperm.xlu0 %792, %v790
    %v794 = vpop.permute.xlu0 %793
    %v796 = vlaneseq
    %v797 = vshrl.u32 %v796, 7
    %v798 = vsub.s32 0, %v797
    %v799 = vrot.slane %v794, %v798
    %v801 = vlaneseq
    %v802 = vshrl.u32 %v801, 7
    %v803 = vsub.s32 0, %v802
    %v804 = vrot.slane %v789, %v803
    %v805 = vlaneseq
    %v806 = vshrl.u32 %v805, 7
    %v807 = vsub.s32 1, %v806
    %v808 = vrot.slane %v789, %v807
    %811 = vmatprep.subr.mxu0 0.0
    %812 = vmatpush1.xpose.msra.mxu0 0.0
    %813 = vmatprep.subr.mxu0 0.0
    %814 = vmatpush1.xpose.msra.mxu0 0.0
    %815 = vmatprep.subr.mxu0 0.0
    %816 = vmatpush1.xpose.msra.mxu0 0.0
    %817 = vmatprep.subr.mxu0 0.0
    %818 = vmatpush1.xpose.msra.mxu0 0.0
    %819 = vmatprep.subr.mxu0 0.0
    %820 = vmatpush1.xpose.msra.mxu0 0.0
    %821 = vmatprep.subr.mxu0 0.0
    %822 = vmatpush1.xpose.msra.mxu0 0.0
    %823 = vmatprep.subr.mxu0 0.0
    %824 = vmatpush1.xpose.msra.mxu0 0.0
    %825 = vmatprep.subr.mxu0 0.0
    %826 = vmatpush1.xpose.msra.mxu0 0.0
    %827 = vmatprep.subr.mxu0 0.0
    %828 = vmatpush1.xpose.msra.mxu0 0.0
    %829 = vmatprep.subr.mxu0 0.0
    %830 = vmatpush1.xpose.msra.mxu0 0.0
    %831 = vmatprep.subr.mxu0 0.0
    %832 = vmatpush1.xpose.msra.mxu0 0.0
    %833 = vmatprep.subr.mxu0 0.0
    %834 = vmatpush1.xpose.msra.mxu0 0.0
    %835 = vmatprep.subr.mxu0 0.0
    %836 = vmatpush1.xpose.msra.mxu0 0.0
    %837 = vmatprep.subr.mxu0 0.0
    %838 = vmatpush1.xpose.msra.mxu0 0.0
    %839 = vmatprep.subr.mxu0 0.0
    %840 = vmatpush1.xpose.msra.mxu0 0.0
    %841 = vmatprep.subr.mxu0 %v788
    %842 = vmatpush1.xpose.msra.mxu0 %v787
    %843 = vmatprep.subr.mxu0 0.0
    %844 = vmatpush2.xpose.msra.mxu0 0.0
    %845 = vmatprep.subr.mxu0 0.0
    %846 = vmatpush2.xpose.msra.mxu0 0.0
    %847 = vmatprep.subr.mxu0 0.0
    %848 = vmatpush2.xpose.msra.mxu0 0.0
    %849 = vmatprep.subr.mxu0 0.0
    %850 = vmatpush2.xpose.msra.mxu0 0.0
    %851 = vmatprep.subr.mxu0 0.0
    %852 = vmatpush2.xpose.msra.mxu0 0.0
    %853 = vmatprep.subr.mxu0 0.0
    %854 = vmatpush2.xpose.msra.mxu0 0.0
    %855 = vmatprep.subr.mxu0 0.0
    %856 = vmatpush2.xpose.msra.mxu0 0.0
    %857 = vmatprep.subr.mxu0 0.0
    %858 = vmatpush2.xpose.msra.mxu0 0.0
    %859 = vmatprep.subr.mxu0 0.0
    %860 = vmatpush2.xpose.msra.mxu0 0.0
    %861 = vmatprep.subr.mxu0 0.0
    %862 = vmatpush2.xpose.msra.mxu0 0.0
    %863 = vmatprep.subr.mxu0 0.0
    %864 = vmatpush2.xpose.msra.mxu0 0.0
    %865 = vmatprep.subr.mxu0 0.0
    %866 = vmatpush2.xpose.msra.mxu0 0.0
    %867 = vmatprep.subr.mxu0 0.0
    %868 = vmatpush2.xpose.msra.mxu0 0.0
    %869 = vmatprep.subr.mxu0 0.0
    %870 = vmatpush2.xpose.msra.mxu0 0.0
    %871 = vmatprep.subr.mxu0 0.0
    %872 = vmatpush2.xpose.msra.mxu0 0.0
    %873 = vmatprep.subr.mxu0 0.0
    %874 = vmatpush2.xpose.msra.mxu0 0.0
    %875 = vmatprep.mubr.f32.mxu0 %v808
    %876 = vmatmul.mubr.f32.gmra.mxu0 %v804
    %v877 = vpop.f32.mrf.mxu0
    %v878 = vadd.f32 %v799, %v877
    %v879 = vpop.f32.mrf.mxu0
    %880 = vdwg.mxu0
    %vm881 = vcmask 57344
    %882 = vst.msk [vmem:[#allocation14] sm:$0x1] %vm881, %v878
    // Predicated region
    $region70: #{tpu_custom_call.1} parent=1 // pred_check
      _
    $region71: #{tpu_custom_call.1} parent=1 // pred_check_branch
      %884 = sbr.rel (0) target = $region73
    $region72: #{tpu_custom_call.1} parent=1 // pred_region
      %s886 = ssub.s32 16, 16
      %887 = vsyncadd [#allocation5], %s886
      %s889 = sshll.u32 [#allocation14], 4
      %s890 = int_to_ptr.vmem [resolvable:$true] %s889
      %892 = dma.vmem_to_hbm [thread:$0]  %s890, 16, %s11, [#allocation5]
    $region73: #{tpu_custom_call.1} parent=1 // pred_fallthru
      _
    // Predicated region
    $region74: #{tpu_custom_call.1} parent=1 // pred_check
      _
    $region75: #{tpu_custom_call.1} parent=1 // pred_check_branch
      %894 = sbr.rel (0) target = $region77
    $region76: #{tpu_custom_call.1} parent=1 // pred_region
      %895 = dma.done [#allocation5], 16
    $region77: #{tpu_custom_call.1} parent=1 // pred_fallthru
      _
    %896 = vsyncpa [#allocation4], 1
    %897 = vsyncpa [#allocation7], 1
    %898 = vsyncpa [#allocation10], 1
    %899 = vsyncpa [#allocation13], 1
    %900 = vsyncpa [#allocation5], 1

</llo_original>
